<compile_context>
chip_gen: v5e
topology: v5e:2x2
jax: 0.10.0
libtpu: 0.0.40
codegen_flags: <defaults>
</compile_context>

<pallas_src>
import functools
import math

import numpy as np
import jax
import jax.numpy as jnp
from jax.experimental import pallas as pl
from jax.experimental.pallas import tpu as pltpu


# ------------------------------ Pallas kernels ------------------------------ #

def _hw_interp_kernel(x_ref, mh_ref, mwT_ref, o_ref, *, mh_first):
    """One (n, c, d) slice: o = Mh @ x @ Mw^T  (factor pre-folded into Mw^T).

    x_ref:   (1, H, W)
    mh_ref:  (Ho, H)
    mwT_ref: (W, Wo)
    o_ref:   (1, Ho, Wo)
    """
    x = x_ref[0]                                                         # (H, W)
    if mh_first:
        t = jnp.dot(mh_ref[...], x, preferred_element_type=jnp.float32)   # (Ho, W)
        y = jnp.dot(t, mwT_ref[...], preferred_element_type=jnp.float32)  # (Ho, Wo)
    else:
        t = jnp.dot(x, mwT_ref[...], preferred_element_type=jnp.float32)  # (H, Wo)
        y = jnp.dot(mh_ref[...], t, preferred_element_type=jnp.float32)   # (Ho, Wo)
    o_ref[0] = y.astype(o_ref.dtype)


def _d_interp_kernel(x_ref, md_ref, o_ref):
    """One (n, c) volume, one lane tile: o = Md @ X.

    x_ref:  (1, D, TN)
    md_ref: (Do, D)
    o_ref:  (1, Do, TN)
    """
    o_ref[0] = jnp.dot(md_ref[...], x_ref[0],
                       preferred_element_type=jnp.float32).astype(o_ref.dtype)


# ------------------------------- host helpers ------------------------------ #

def _linear_interp_matrix(in_size, out_size):
    """(out_size, in_size) matrix for 1-D linear interp, align_corners=True."""
    m = np.zeros((out_size, in_size), dtype=np.float32)
    if out_size == 1 or in_size == 1:
        m[:, 0] = 1.0
        return m
    src = np.arange(out_size, dtype=np.float64) * (in_size - 1) / (out_size - 1)
    i0 = np.clip(np.floor(src).astype(np.int64), 0, in_size - 1)
    i1 = np.minimum(i0 + 1, in_size - 1)
    frac = (src - i0).astype(np.float32)
    rows = np.arange(out_size)
    np.add.at(m, (rows, i0), 1.0 - frac)
    np.add.at(m, (rows, i1), frac)
    return m


def _lane_tile(n, max_tile=2048):
    """Largest multiple-of-128 divisor of n that is <= max_tile (else n itself)."""
    if n <= max_tile:
        return n
    for t in range(max_tile - (max_tile % 128), 0, -128):
        if n % t == 0:
            return t
    return n  # no nice divisor: use the full extent (block == full dim is legal)


@functools.partial(jax.jit, static_argnames=("vel_resize", "ndims"))
def resize_transform(x, *, vel_resize, ndims=3):
    """ResizeTransform.forward.  x: (N, C, *spatial)."""
    factor = 1.0 / float(vel_resize)
    if factor == 1.0:
        return x

    orig_dtype = x.dtype
    if ndims == 3:
        N, C, D, H, W = x.shape
    elif ndims == 2:
        N, C, H, W = x.shape
        D = 1
    elif ndims == 1:
        N, C, W = x.shape
        D, H = 1, 1
    else:
        raise ValueError("ndims must be 1, 2 or 3")

    # Output sizes exactly as PyTorch: floor(in * scale) in double precision.
    Do = int(math.floor(D * factor)) if ndims >= 3 else D
    Ho = int(math.floor(H * factor)) if ndims >= 2 else H
    Wo = int(math.floor(W * factor))

    # 1-D interpolation matrices; fold the `factor` rescale into Mw^T (applied
    # exactly once to every output element) -> no epilogue multiply in-kernel.
    mh = _linear_interp_matrix(H, Ho)
    mwT = np.ascontiguousarray(_linear_interp_matrix(W, Wo).T) * np.float32(factor)

    NC = N * C
    NCD = NC * D
    x3 = x.reshape(NCD, H, W).astype(jnp.float32)

    # Pick the GEMM order with the fewer MACs (review: order by factor).
    macs_mh_first = Ho * H * W + Ho * W * Wo
    macs_mw_first = H * W * Wo + Ho * H * Wo
    mh_first = macs_mh_first <= macs_mw_first

    hw_kernel = functools.partial(_hw_interp_kernel, mh_first=mh_first)

    out_hw = pl.pallas_call(
        hw_kernel,
        out_shape=jax.ShapeDtypeStruct((NCD, Ho, Wo), jnp.float32),
        grid=(NCD,),
        in_specs=[
            pl.BlockSpec((1, H, W), lambda i: (i, 0, 0)),
            pl.BlockSpec((Ho, H), lambda i: (0, 0)),
            pl.BlockSpec((W, Wo), lambda i: (0, 0)),
        ],
        out_specs=pl.BlockSpec((1, Ho, Wo), lambda i: (i, 0, 0)),
        compiler_params=pltpu.CompilerParams(dimension_semantics=("parallel",)),
    )(x3, jnp.asarray(mh), jnp.asarray(mwT))

    # Depth-axis interpolation (only when it actually resizes; Do == D -> Md = I).
    if ndims == 3 and Do != D:
        md = _linear_interp_matrix(D, Do)
        HoWo = Ho * Wo
        TN = _lane_tile(HoWo)
        n_tiles = HoWo // TN
        x_d = out_hw.reshape(NC, D, HoWo)          # free row-major reshape in HBM
        out = pl.pallas_call(
            _d_interp_kernel,
            out_shape=jax.ShapeDtypeStruct((NC, Do, HoWo), jnp.float32),
            grid=(NC, n_tiles),
            in_specs=[
                pl.BlockSpec((1, D, TN), lambda i, j: (i, 0, j)),
                pl.BlockSpec((Do, D), lambda i, j: (0, 0)),
            ],
            out_specs=pl.BlockSpec((1, Do, TN), lambda i, j: (i, 0, j)),
            compiler_params=pltpu.CompilerParams(
                dimension_semantics=("parallel", "parallel")),
        )(x_d, jnp.asarray(md))
        out = out.reshape(N, C, Do, Ho, Wo)
    else:
        if ndims == 3:
            out = out_hw.reshape(N, C, D, Ho, Wo)
        elif ndims == 2:
            out = out_hw.reshape(N, C, Ho, Wo)
        else:
            out = out_hw.reshape(N, C, Wo)

    return out.astype(orig_dtype)


# ------------------------- numpy reference (checking) ----------------------- #

def _np_interp_axis(x, out_size, axis):
    in_size = x.shape[axis]
    if out_size == 1 or in_size == 1:
        src = np.zeros(out_size)
    else:
        src = np.arange(out_size) * (in_size - 1) / (out_size - 1)
    i0 = np.clip(np.floor(src).astype(np.int64), 0, in_size - 1)
    i1 = np.minimum(i0 + 1, in_size - 1)
    frac = src - i0
    x0 = np.take(x, i0, axis=axis)
    x1 = np.take(x, i1, axis=axis)
    shape = [1] * x.ndim
    shape[axis] = out_size
    frac = frac.reshape(shape)
    return x0 * (1.0 - frac) + x1 * frac


def _reference_resize_transform(x, vel_resize, ndims=3):
    factor = 1.0 / vel_resize
    y = np.asarray(x, dtype=np.float64)
    if factor == 1.0:
        return y.astype(np.float32)
    if factor > 1:
        y = factor * y
    for ax in range(2, 2 + ndims):
        out_size = int(math.floor(y.shape[ax] * factor))
        y = _np_interp_axis(y, out_size, ax)
    if factor < 1:
        y = factor * y
    return y.astype(np.float32)


# ---------------------------------- main ----------------------------------- #

if __name__ == "__main__":
    key = jax.random.PRNGKey(0)
    N, C, D, H, W = 2, 3, 8, 16, 16            # 3-D flow field: C == ndims == 3
    x = jax.random.normal(key, (N, C, D, H, W), dtype=jnp.float32)

    # factor > 1 branch: vel_resize = 0.5 -> upsample x2 and rescale by 2.
    out_up = jax.block_until_ready(resize_transform(x, vel_resize=0.5, ndims=3))
    assert out_up.shape == (N, C, 2 * D, 2 * H, 2 * W), out_up.shape
    assert bool(jnp.all(jnp.isfinite(out_up)))
    ref_up = _reference_resize_transform(np.asarray(x), 0.5, ndims=3)
    assert np.allclose(np.asarray(out_up), ref_up, rtol=1e-4, atol=1e-4)

    # factor < 1 branch: vel_resize = 2.0 -> downsample /2 and rescale by 0.5.
    out_dn = jax.block_until_ready(resize_transform(x, vel_resize=2.0, ndims=3))
    assert out_dn.shape == (N, C, D // 2, H // 2, W // 2), out_dn.shape
    ref_dn = _reference_resize_transform(np.asarray(x), 2.0, ndims=3)
    assert np.allclose(np.asarray(out_dn), ref_dn, rtol=1e-4, atol=1e-4)

    # 2-D path (bilinear): no depth kernel.
    x2 = jax.random.normal(jax.random.PRNGKey(1), (2, 2, 16, 16), dtype=jnp.float32)
    out_2d = jax.block_until_ready(resize_transform(x2, vel_resize=0.5, ndims=2))
    assert out_2d.shape == (2, 2, 32, 32), out_2d.shape
    ref_2d = _reference_resize_transform(np.asarray(x2), 0.5, ndims=2)
    assert np.allclose(np.asarray(out_2d), ref_2d, rtol=1e-4, atol=1e-4)

    print("KERNEL_OK")
</pallas_src>

<mosaic_0001>
module attributes {stable_mosaic.version = 11 : i64} {
  func.func @_d_interp_kernel(%arg0: i32, %arg1: i32, %arg2: memref<1x8x1024xf32, #tpu.memory_space<vmem>>, %arg3: memref<16x8xf32, #tpu.memory_space<vmem>>, %arg4: memref<1x16x1024xf32, #tpu.memory_space<vmem>>) attributes {dimension_semantics = [#tpu.dimension_semantics<parallel>, #tpu.dimension_semantics<parallel>], iteration_bounds = array<i64: 6, 1>, scalar_prefetch = 0 : i64, scratch_operands = 0 : i64, tpu.core_type = #tpu.core_type<tc>, window_params = [{transform_indices = @transform_0, window_bounds = array<i64: 1, 8, 1024>}, {pipeline_mode = #tpu.pipeline_mode<synchronous>, transform_indices = @transform_1, window_bounds = array<i64: 16, 8>}, {transform_indices = @transform_2, window_bounds = array<i64: 1, 16, 1024>}]} {
    %c0 = arith.constant 0 : index
    %c0_0 = arith.constant 0 : index
    %0 = vector.load %arg3[%c0, %c0_0] : memref<16x8xf32, #tpu.memory_space<vmem>>, vector<16x8xf32>
    %c0_1 = arith.constant 0 : index
    %c0_2 = arith.constant 0 : index
    %c0_3 = arith.constant 0 : index
    %1 = vector.load %arg2[%c0_1, %c0_2, %c0_3] : memref<1x8x1024xf32, #tpu.memory_space<vmem>>, vector<1x8x1024xf32>
    %2 = vector.shape_cast %1 : vector<1x8x1024xf32> to vector<8x1024xf32>
    %cst = arith.constant dense<0.000000e+00> : vector<16x1024xf32>
    %3 = tpu.matmul %0, %2, %cst {dimension_numbers = #tpu.dot_dimension_numbers<[1], [0], [0], [1], [0, 0, 1, 1], [], []>} : vector<16x8xf32>, vector<8x1024xf32>, vector<16x1024xf32> -> vector<16x1024xf32>
    %c0_4 = arith.constant 0 : index
    %c0_5 = arith.constant 0 : index
    %c0_6 = arith.constant 0 : index
    %4 = vector.load %arg4[%c0_4, %c0_5, %c0_6] : memref<1x16x1024xf32, #tpu.memory_space<vmem>>, vector<1x16x1024xf32>
    %5 = vector.shape_cast %4 : vector<1x16x1024xf32> to vector<16x1024xf32>
    %6 = vector.shape_cast %3 : vector<16x1024xf32> to vector<1x16x1024xf32>
    tpu.vector_store %arg4[%c0_4, %c0_5, %c0_6], %6 {strides = array<i32>} : memref<1x16x1024xf32, #tpu.memory_space<vmem>>, vector<1x16x1024xf32>,
    return
  }
  func.func @transform_0(%arg0: i32, %arg1: i32) -> (i32, i32, i32) {
    %c0_i32 = arith.constant 0 : i32
    %c0_i32_0 = arith.constant 0 : i32
    return %arg0, %c0_i32, %arg1 : i32, i32, i32
  }
  func.func @transform_1(%arg0: i32, %arg1: i32) -> (i32, i32) {
    %c0_i32 = arith.constant 0 : i32
    %c0_i32_0 = arith.constant 0 : i32
    %c0_i32_1 = arith.constant 0 : i32
    return %c0_i32, %c0_i32_0 : i32, i32
  }
  func.func @transform_2(%arg0: i32, %arg1: i32) -> (i32, i32, i32) {
    %c0_i32 = arith.constant 0 : i32
    %c0_i32_0 = arith.constant 0 : i32
    return %arg0, %c0_i32, %arg1 : i32, i32, i32
  }
}

module attributes {stable_mosaic.version = 11 : i64} {
  func.func @_hw_interp_kernel(%arg0: i32, %arg1: memref<1x16x16xf32, #tpu.memory_space<vmem>>, %arg2: memref<32x16xf32, #tpu.memory_space<vmem>>, %arg3: memref<16x32xf32, #tpu.memory_space<vmem>>, %arg4: memref<1x32x32xf32, #tpu.memory_space<vmem>>) attributes {dimension_semantics = [#tpu.dimension_semantics<parallel>], iteration_bounds = array<i64: 48>, scalar_prefetch = 0 : i64, scratch_operands = 0 : i64, tpu.core_type = #tpu.core_type<tc>, window_params = [{transform_indices = @transform_0, window_bounds = array<i64: 1, 16, 16>}, {pipeline_mode = #tpu.pipeline_mode<synchronous>, transform_indices = @transform_1, window_bounds = array<i64: 32, 16>}, {pipeline_mode = #tpu.pipeline_mode<synchronous>, transform_indices = @transform_2, window_bounds = array<i64: 16, 32>}, {transform_indices = @transform_3, window_bounds = array<i64: 1, 32, 32>}]} {
    %c0 = arith.constant 0 : index
    %c0_0 = arith.constant 0 : index
    %c0_1 = arith.constant 0 : index
    %0 = vector.load %arg1[%c0, %c0_0, %c0_1] : memref<1x16x16xf32, #tpu.memory_space<vmem>>, vector<1x16x16xf32>
    %1 = vector.shape_cast %0 : vector<1x16x16xf32> to vector<16x16xf32>
    %c0_2 = arith.constant 0 : index
    %c0_3 = arith.constant 0 : index
    %2 = vector.load %arg2[%c0_2, %c0_3] : memref<32x16xf32, #tpu.memory_space<vmem>>, vector<32x16xf32>
    %cst = arith.constant dense<0.000000e+00> : vector<32x16xf32>
    %3 = tpu.matmul %2, %1, %cst {dimension_numbers = #tpu.dot_dimension_numbers<[1], [0], [0], [1], [0, 0, 1, 1], [], []>} : vector<32x16xf32>, vector<16x16xf32>, vector<32x16xf32> -> vector<32x16xf32>
    %c0_4 = arith.constant 0 : index
    %c0_5 = arith.constant 0 : index
    %4 = vector.load %arg3[%c0_4, %c0_5] : memref<16x32xf32, #tpu.memory_space<vmem>>, vector<16x32xf32>
    %cst_6 = arith.constant dense<0.000000e+00> : vector<32x32xf32>
    %5 = tpu.matmul %3, %4, %cst_6 {dimension_numbers = #tpu.dot_dimension_numbers<[1], [0], [0], [1], [0, 0, 1, 1], [], []>} : vector<32x16xf32>, vector<16x32xf32>, vector<32x32xf32> -> vector<32x32xf32>
    %c0_7 = arith.constant 0 : index
    %c0_8 = arith.constant 0 : index
    %c0_9 = arith.constant 0 : index
    %6 = vector.load %arg4[%c0_7, %c0_8, %c0_9] : memref<1x32x32xf32, #tpu.memory_space<vmem>>, vector<1x32x32xf32>
    %7 = vector.shape_cast %6 : vector<1x32x32xf32> to vector<32x32xf32>
    %8 = vector.shape_cast %5 : vector<32x32xf32> to vector<1x32x32xf32>
    tpu.vector_store %arg4[%c0_7, %c0_8, %c0_9], %8 {strides = array<i32>} : memref<1x32x32xf32, #tpu.memory_space<vmem>>, vector<1x32x32xf32>,
    return
  }
  func.func @transform_0(%arg0: i32) -> (i32, i32, i32) {
    %c0_i32 = arith.constant 0 : i32
    %c0_i32_0 = arith.constant 0 : i32
    %c0_i32_1 = arith.constant 0 : i32
    return %arg0, %c0_i32, %c0_i32_0 : i32, i32, i32
  }
  func.func @transform_1(%arg0: i32) -> (i32, i32) {
    %c0_i32 = arith.constant 0 : i32
    %c0_i32_0 = arith.constant 0 : i32
    %c0_i32_1 = arith.constant 0 : i32
    return %c0_i32, %c0_i32_0 : i32, i32
  }
  func.func @transform_2(%arg0: i32) -> (i32, i32) {
    %c0_i32 = arith.constant 0 : i32
    %c0_i32_0 = arith.constant 0 : i32
    %c0_i32_1 = arith.constant 0 : i32
    return %c0_i32, %c0_i32_0 : i32, i32
  }
  func.func @transform_3(%arg0: i32) -> (i32, i32, i32) {
    %c0_i32 = arith.constant 0 : i32
    %c0_i32_0 = arith.constant 0 : i32
    %c0_i32_1 = arith.constant 0 : i32
    return %arg0, %c0_i32, %c0_i32_0 : i32, i32, i32
  }
}

</mosaic_0001>

<llo_original>
// kernel: resize_transform.3
$region0: #{resize_transform.3}
  #allocation0 [shape = 'u32[]', space=smem, size = 0x4, offset = 0x4, fixed_abs, tag = 'smem constant byte address 0x4 - core index']
  #allocation1 [shape = 'u32[72,128]{1,0:T(1,128)}', space=vmem, size = 0x9000, scoped, tag = 'internal scratch']
  %s0 = inlined_call_operand.vmem [shape: f32[6,8,1024], index: 0, kind: input, shape index: {}]
  %s1 = inlined_call_operand.hbm [shape: f32[16,8], index: 1, kind: input, shape index: {}]
  %s2 = inlined_call_operand.vmem [shape: f32[6,16,1024], index: 2, kind: output, shape index: {}]
  %s3 = sld [smem:[#allocation0]]
  $region45: #{resize_transform.3} parent=0
    _
  %s5 = ssub.s32 1, %s3
  %s6 = scalar_select 0, %s5, %s3
  $region1: #{resize_transform.3} parent=0
    #allocation2 [shape = 'u8[8192]{0}', space=vmem, size = 0x2000, scoped, tag = 'input window, operand 1, single buffered']
    #allocation3 [shape = 's32[2]{0}', space=sflag, size = 0x8, scoped, tag = 'scoped memory for resize_transform.3']
    %7 = vsyncpa [#allocation3], 0
    loop: start=0, step=1, limit=8
    $region2: #{resize_transform.3} parent=1 // loop_pre_header
      _
    $region3: #{resize_transform.3} parent=1 // loop_header
      %s9 = sphi 0, %s13
      %p10 = scmp.ge.s32.totalorder %s9, 8
      %s16 = sphi 0, %s28
      %s17 = sphi 0, %s24
      %s18 = sphi 0, %s16
      %s19 = sphi 0, %s17
      %s20 = sphi 0, %s18
      %s21 = sphi 0, %s19
      %s33 = sphi 0, %s35
      %s36 = sphi 0, %s33
      %s37 = sphi 0, %s36
      %s53 = sphi 0, %s37
      %s57 = sphi 0, %s57
      %s59 = sphi 0, %s57
      %s60 = sphi 0, %s59
      %s74 = sphi 0, %s60
      %s82 = sphi 0, %s84
      %s85 = sphi 0, %s82
      %s86 = sphi 0, %s85
      %s102 = sphi 0, %s86
    $region4: #{resize_transform.3} parent=1 // loop_header_branch
      %12 = sbr.rel (%p10) target = $region8
    $region5: #{resize_transform.3} parent=1 // loop_body
      %s14 = ssub.s32 %s9, 1
      %s15 = ssub.s32 %s9, 2
      %s22 = sadd.s32 1, %s17
      %p23 = scmp.ge.s32.totalorder %s22, 1
      %s24 = scalar_select %p23, 0, %s22
      %s25 = sadd.s32 1, %s16
      %s26 = scalar_select %p23, %s25, %s16
      %p27 = scmp.ge.s32.totalorder %s26, 6
      %s28 = scalar_select %p27, 0, %s26
      %s29 = ssub.s32 %s16, %s28
      %s30 = ssub.s32 %s17, %s24
      %s31 = sor.u32 %s29, %s30
      %p32 = scmp.eq.s32.totalorder %s31, 0
      %s34 = sadd.s32 %s33, 1
      %s35 = scalar_select %p32, %s33, %s34
      %p38 = pneg %p32
      %p39 = scmp.eq.s32.totalorder %s9, 5
      %p40 = por %p38, %p39
      %p41 = scmp.ne.s32.totalorder %s33, %s36
      %p42 = scmp.eq.s32.totalorder %s9, 0
      %p43 = por %p41, %p42
      %p44 = scmp.ne.s32.totalorder %s33, %s36
      %p45 = scmp.eq.s32.totalorder %s14, 5
      %p46 = por %p44, %p45
      %p47 = scmp.ne.s32.totalorder %s36, %s37
      %p48 = scmp.eq.s32.totalorder %s14, 0
      %p49 = por %p47, %p48
      %p50 = scmp.ne.s32.totalorder %s36, %s37
      %p51 = scmp.eq.s32.totalorder %s15, 5
      %p52 = por %p50, %p51
      %p54 = scmp.ne.s32.totalorder %s37, %s53
      %p55 = scmp.eq.s32.totalorder %s15, 0
      %p56 = por %p54, %p55
      %s58 = sadd.s32 %s57, 1
      %p61 = scmp.eq.s32.totalorder %s9, 5
      %p62 = scmp.ne.s32.totalorder %s57, %s59
      %p63 = scmp.eq.s32.totalorder %s9, 0
      %p64 = por %p62, %p63
      %p65 = scmp.ne.s32.totalorder %s57, %s59
      %p66 = scmp.eq.s32.totalorder %s14, 5
      %p67 = por %p65, %p66
      %p68 = scmp.ne.s32.totalorder %s59, %s60
      %p69 = scmp.eq.s32.totalorder %s14, 0
      %p70 = por %p68, %p69
      %p71 = scmp.ne.s32.totalorder %s59, %s60
      %p72 = scmp.eq.s32.totalorder %s15, 5
      %p73 = por %p71, %p72
      %p75 = scmp.ne.s32.totalorder %s60, %s74
      %p76 = scmp.eq.s32.totalorder %s15, 0
      %p77 = por %p75, %p76
      %s78 = ssub.s32 %s16, %s28
      %s79 = ssub.s32 %s17, %s24
      %s80 = sor.u32 %s78, %s79
      %p81 = scmp.eq.s32.totalorder %s80, 0
      %s83 = sadd.s32 %s82, 1
      %s84 = scalar_select %p81, %s82, %s83
      %p87 = pneg %p81
      %p88 = scmp.eq.s32.totalorder %s9, 5
      %p89 = por %p87, %p88
      %p90 = scmp.ne.s32.totalorder %s82, %s85
      %p91 = scmp.eq.s32.totalorder %s9, 0
      %p92 = por %p90, %p91
      %p93 = scmp.ne.s32.totalorder %s82, %s85
      %p94 = scmp.eq.s32.totalorder %s14, 5
      %p95 = por %p93, %p94
      %p96 = scmp.ne.s32.totalorder %s85, %s86
      %p97 = scmp.eq.s32.totalorder %s14, 0
      %p98 = por %p96, %p97
      %p99 = scmp.ne.s32.totalorder %s85, %s86
      %p100 = scmp.eq.s32.totalorder %s15, 5
      %p101 = por %p99, %p100
      %p103 = scmp.ne.s32.totalorder %s86, %s102
      %p104 = scmp.eq.s32.totalorder %s15, 0
      %p105 = por %p103, %p104
      %p106 = scmp.le.s32.totalorder 1, %s9
      %p107 = scmp.lt.s32.totalorder %s9, 7
      %p108 = pnand %p106, %p107
      %p109 = pneg %p108
      // Predicated region
      $region9: #{resize_transform.3} parent=5 // pred_check
        _
      $region10: #{resize_transform.3} parent=5 // pred_check_branch
        %111 = sbr.rel (%p108) target = $region12
      $region11: #{resize_transform.3} parent=5 // pred_region
        %s112 = ssub.s32 %s9, 1
        // Predicated region
        $region13: #{resize_transform.3} parent=11 // pred_check
          %p113 = pneg %p70
        $region14: #{resize_transform.3} parent=11 // pred_check_branch
          %115 = sbr.rel (%p113) target = $region16
        $region15: #{resize_transform.3} parent=11 // pred_region
          %117 = vsyncadd [#allocation3], 0
          %s118 = sshll.u32 %s1, 4
          %s119 = int_to_ptr.hbm [resolvable:$true] %s118
          %s120 = sshll.u32 [#allocation2], 4
          %s121 = int_to_ptr.vmem [resolvable:$true] %s120
          %126 = dma.hbm_to_vmem [thread:$0]  %s119, 256, %s121, [#allocation3], 128, 128, 8
        $region16: #{resize_transform.3} parent=11 // pred_fallthru
          _
      $region12: #{resize_transform.3} parent=5 // pred_fallthru
        _
      %p127 = scmp.lt.s32.totalorder %s9, 6
      // Predicated region
      $region17: #{resize_transform.3} parent=5 // pred_check
        %p128 = pneg %p127
      $region18: #{resize_transform.3} parent=5 // pred_check_branch
        %130 = sbr.rel (%p128) target = $region20
      $region19: #{resize_transform.3} parent=5 // pred_region
        // Predicated region
        $region21: #{resize_transform.3} parent=19 // pred_check
          %p131 = pneg %p43
        $region22: #{resize_transform.3} parent=19 // pred_check_branch
          %133 = sbr.rel (%p131) target = $region24
        $region23: #{resize_transform.3} parent=19 // pred_region
          %s134 = smul.u32 8, %s17
          %p135 = scmp.lt.s32.totalorder %s16, 5
          %s136 = scalar_select %p135, %s16, 5
          %p137 = scmp.lt.s32.totalorder %s134, 7
          %s138 = scalar_select %p137, %s134, 7
          %s139 = smul.addr %s136, 8
          %s140 = sadd.s32 %s138, %s139
          %s141 = smul.addr %s140, 8
          %s142 = scalar_lea.vmem %s0, %s141
          %s143 = smul.u32 8, %s17
        $region24: #{resize_transform.3} parent=19 // pred_fallthru
          _
      $region20: #{resize_transform.3} parent=5 // pred_fallthru
        _
      %p144 = scmp.le.s32.totalorder 1, %s9
      %p145 = scmp.lt.s32.totalorder %s9, 7
      %p146 = pnand %p144, %p145
      %p147 = pneg %p146
      // Predicated region
      $region25: #{resize_transform.3} parent=5 // pred_check
        _
      $region26: #{resize_transform.3} parent=5 // pred_check_branch
        %149 = sbr.rel (%p146) target = $region28
      $region27: #{resize_transform.3} parent=5 // pred_region
        %s150 = ssub.s32 %s9, 1
        // Predicated region
        $region29: #{resize_transform.3} parent=27 // pred_check
          %p151 = pneg %p70
        $region30: #{resize_transform.3} parent=27 // pred_check_branch
          %153 = sbr.rel (%p151) target = $region32
        $region31: #{resize_transform.3} parent=27 // pred_region
          %155 = dma.done [#allocation3], 256
        $region32: #{resize_transform.3} parent=27 // pred_fallthru
          _
        %s156 = smul.u32 8, %s19
        %p157 = scmp.lt.s32.totalorder %s18, 5
        %s158 = scalar_select %p157, %s18, 5
        %p159 = scmp.lt.s32.totalorder %s156, 7
        %s160 = scalar_select %p159, %s156, 7
        %s161 = smul.addr %s158, 8
        %s162 = sadd.s32 %s160, %s161
        %s163 = smul.addr %s162, 8
        %s164 = scalar_lea.vmem %s0, %s163
        %p165 = pneg %p49
        %p166 = pneg %p46
        %p167 = pneg %p70
        %p168 = pneg %p67
        %p169 = pneg %p98
        %p170 = pneg %p95
        %s171 = smul.u32 8, %s19
        %p172 = scmp.lt.s32.totalorder %s18, 5
        %s173 = scalar_select %p172, %s18, 5
        %p174 = scmp.lt.s32.totalorder %s171, 7
        %s175 = scalar_select %p174, %s171, 7
        %s176 = smul.addr %s173, 16
        %s177 = sadd.s32 %s175, %s176
        %s178 = smul.addr %s177, 8
        %s179 = scalar_lea.vmem %s2, %s178
        %s180 = smul.u32 8, %s19
        %p181 = scmp.lt.s32.totalorder %s18, 5
        %s182 = scalar_select %p181, %s18, 5
        %p183 = scmp.lt.s32.totalorder %s180, 7
        %s184 = scalar_select %p183, %s180, 7
        %s185 = smul.addr %s182, 8
        %s186 = sadd.s32 %s184, %s185
        %s187 = smul.addr %s186, 8
        %s188 = scalar_lea.vmem %s0, %s187
        %s189 = smul.u32 8, %s19
        %s190 = smul.u32 8, %s19
        %p191 = scmp.lt.s32.totalorder %s18, 5
        %s192 = scalar_select %p191, %s18, 5
        %p193 = scmp.lt.s32.totalorder %s190, 7
        %s194 = scalar_select %p193, %s190, 7
        %s195 = smul.addr %s192, 16
        %s196 = sadd.s32 %s194, %s195
        %s197 = smul.addr %s196, 8
        %s198 = scalar_lea.vmem %s2, %s197
        %s199 = smul.u32 8, %s19
        %v200 = vld [vmem:[#allocation2] sm:$0xff]
        %v201 = vld [vmem:[#allocation2 + $0x8] sm:$0xff]
        %v202 = vld [vmem:[%s188] sm:$0xff]
        %v203 = vld [vmem:[%s188 + $0x8] sm:$0xff]
        %v204 = vld [vmem:[%s188 + $0x10] sm:$0xff]
        %v205 = vld [vmem:[%s188 + $0x18] sm:$0xff]
        %v206 = vld [vmem:[%s188 + $0x20] sm:$0xff]
        %v207 = vld [vmem:[%s188 + $0x28] sm:$0xff]
        %v208 = vld [vmem:[%s188 + $0x30] sm:$0xff]
        %v209 = vld [vmem:[%s188 + $0x38] sm:$0xff]
        %vm210 = vcmask 64512
        %v212 = vsel %vm210, %v200, 0
        %v215 = vsel %vm210, %v201, 0
        %217 = vmatpush.msra.mxu0 0.0
        %218 = vmatpush.msra.mxu0 0.0
        %219 = vmatpush.msra.mxu0 0.0
        %220 = vmatpush.msra.mxu0 0.0
        %221 = vmatpush.msra.mxu0 0.0
        %222 = vmatpush.msra.mxu0 0.0
        %223 = vmatpush.msra.mxu0 0.0
        %224 = vmatpush.msra.mxu0 0.0
        %225 = vmatpush.msra.mxu0 0.0
        %226 = vmatpush.msra.mxu0 0.0
        %227 = vmatpush.msra.mxu0 0.0
        %228 = vmatpush.msra.mxu0 0.0
        %229 = vmatpush.msra.mxu0 0.0
        %230 = vmatpush.msra.mxu0 0.0
        %231 = vmatpush.msra.mxu0 0.0
        %232 = vmatpush.msra.mxu0 %v202
        %233 = vmatmul.f32.gmra.mxu0 %v212
        %v234 = vpop.f32.mrf.mxu0
        %v235 = vadd.f32 0.0, %v234
        %236 = vmatmul.f32.gmra.mxu0 %v215
        %v237 = vpop.f32.mrf.mxu0
        %v238 = vadd.f32 0.0, %v237
        %239 = vdwg.mxu0
        %240 = vmatpush.msra.mxu0 0.0
        %241 = vmatpush.msra.mxu0 0.0
        %242 = vmatpush.msra.mxu0 0.0
        %243 = vmatpush.msra.mxu0 0.0
        %244 = vmatpush.msra.mxu0 0.0
        %245 = vmatpush.msra.mxu0 0.0
        %246 = vmatpush.msra.mxu0 0.0
        %247 = vmatpush.msra.mxu0 0.0
        %248 = vmatpush.msra.mxu0 0.0
        %249 = vmatpush.msra.mxu0 0.0
        %250 = vmatpush.msra.mxu0 0.0
        %251 = vmatpush.msra.mxu0 0.0
        %252 = vmatpush.msra.mxu0 0.0
        %253 = vmatpush.msra.mxu0 0.0
        %254 = vmatpush.msra.mxu0 0.0
        %255 = vmatpush.msra.mxu0 %v203
        %256 = vmatmul.f32.gmra.mxu0 %v212
        %v257 = vpop.f32.mrf.mxu0
        %v258 = vadd.f32 0.0, %v257
        %259 = vmatmul.f32.gmra.mxu0 %v215
        %v260 = vpop.f32.mrf.mxu0
        %v261 = vadd.f32 0.0, %v260
        %262 = vdwg.mxu0
        %263 = vmatpush.msra.mxu0 0.0
        %264 = vmatpush.msra.mxu0 0.0
        %265 = vmatpush.msra.mxu0 0.0
        %266 = vmatpush.msra.mxu0 0.0
        %267 = vmatpush.msra.mxu0 0.0
        %268 = vmatpush.msra.mxu0 0.0
        %269 = vmatpush.msra.mxu0 0.0
        %270 = vmatpush.msra.mxu0 0.0
        %271 = vmatpush.msra.mxu0 0.0
        %272 = vmatpush.msra.mxu0 0.0
        %273 = vmatpush.msra.mxu0 0.0
        %274 = vmatpush.msra.mxu0 0.0
        %275 = vmatpush.msra.mxu0 0.0
        %276 = vmatpush.msra.mxu0 0.0
        %277 = vmatpush.msra.mxu0 0.0
        %278 = vmatpush.msra.mxu0 %v204
        %279 = vmatmul.f32.gmra.mxu0 %v212
        %v280 = vpop.f32.mrf.mxu0
        %v281 = vadd.f32 0.0, %v280
        %282 = vmatmul.f32.gmra.mxu0 %v215
        %v283 = vpop.f32.mrf.mxu0
        %v284 = vadd.f32 0.0, %v283
        %285 = vdwg.mxu0
        %286 = vmatpush.msra.mxu0 0.0
        %287 = vmatpush.msra.mxu0 0.0
        %288 = vmatpush.msra.mxu0 0.0
        %289 = vmatpush.msra.mxu0 0.0
        %290 = vmatpush.msra.mxu0 0.0
        %291 = vmatpush.msra.mxu0 0.0
        %292 = vmatpush.msra.mxu0 0.0
        %293 = vmatpush.msra.mxu0 0.0
        %294 = vmatpush.msra.mxu0 0.0
        %295 = vmatpush.msra.mxu0 0.0
        %296 = vmatpush.msra.mxu0 0.0
        %297 = vmatpush.msra.mxu0 0.0
        %298 = vmatpush.msra.mxu0 0.0
        %299 = vmatpush.msra.mxu0 0.0
        %300 = vmatpush.msra.mxu0 0.0
        %301 = vmatpush.msra.mxu0 %v205
        %302 = vmatmul.f32.gmra.mxu0 %v212
        %v303 = vpop.f32.mrf.mxu0
        %v304 = vadd.f32 0.0, %v303
        %305 = vmatmul.f32.gmra.mxu0 %v215
        %v306 = vpop.f32.mrf.mxu0
        %v307 = vadd.f32 0.0, %v306
        %308 = vdwg.mxu0
        %309 = vmatpush.msra.mxu0 0.0
        %310 = vmatpush.msra.mxu0 0.0
        %311 = vmatpush.msra.mxu0 0.0
        %312 = vmatpush.msra.mxu0 0.0
        %313 = vmatpush.msra.mxu0 0.0
        %314 = vmatpush.msra.mxu0 0.0
        %315 = vmatpush.msra.mxu0 0.0
        %316 = vmatpush.msra.mxu0 0.0
        %317 = vmatpush.msra.mxu0 0.0
        %318 = vmatpush.msra.mxu0 0.0
        %319 = vmatpush.msra.mxu0 0.0
        %320 = vmatpush.msra.mxu0 0.0
        %321 = vmatpush.msra.mxu0 0.0
        %322 = vmatpush.msra.mxu0 0.0
        %323 = vmatpush.msra.mxu0 0.0
        %324 = vmatpush.msra.mxu0 %v206
        %325 = vmatmul.f32.gmra.mxu0 %v212
        %v326 = vpop.f32.mrf.mxu0
        %v327 = vadd.f32 0.0, %v326
        %328 = vmatmul.f32.gmra.mxu0 %v215
        %v329 = vpop.f32.mrf.mxu0
        %v330 = vadd.f32 0.0, %v329
        %331 = vdwg.mxu0
        %332 = vmatpush.msra.mxu0 0.0
        %333 = vmatpush.msra.mxu0 0.0
        %334 = vmatpush.msra.mxu0 0.0
        %335 = vmatpush.msra.mxu0 0.0
        %336 = vmatpush.msra.mxu0 0.0
        %337 = vmatpush.msra.mxu0 0.0
        %338 = vmatpush.msra.mxu0 0.0
        %339 = vmatpush.msra.mxu0 0.0
        %340 = vmatpush.msra.mxu0 0.0
        %341 = vmatpush.msra.mxu0 0.0
        %342 = vmatpush.msra.mxu0 0.0
        %343 = vmatpush.msra.mxu0 0.0
        %344 = vmatpush.msra.mxu0 0.0
        %345 = vmatpush.msra.mxu0 0.0
        %346 = vmatpush.msra.mxu0 0.0
        %347 = vmatpush.msra.mxu0 %v207
        %348 = vmatmul.f32.gmra.mxu0 %v212
        %v349 = vpop.f32.mrf.mxu0
        %v350 = vadd.f32 0.0, %v349
        %351 = vmatmul.f32.gmra.mxu0 %v215
        %v352 = vpop.f32.mrf.mxu0
        %v353 = vadd.f32 0.0, %v352
        %354 = vdwg.mxu0
        %355 = vmatpush.msra.mxu0 0.0
        %356 = vmatpush.msra.mxu0 0.0
        %357 = vmatpush.msra.mxu0 0.0
        %358 = vmatpush.msra.mxu0 0.0
        %359 = vmatpush.msra.mxu0 0.0
        %360 = vmatpush.msra.mxu0 0.0
        %361 = vmatpush.msra.mxu0 0.0
        %362 = vmatpush.msra.mxu0 0.0
        %363 = vmatpush.msra.mxu0 0.0
        %364 = vmatpush.msra.mxu0 0.0
        %365 = vmatpush.msra.mxu0 0.0
        %366 = vmatpush.msra.mxu0 0.0
        %367 = vmatpush.msra.mxu0 0.0
        %368 = vmatpush.msra.mxu0 0.0
        %369 = vmatpush.msra.mxu0 0.0
        %370 = vmatpush.msra.mxu0 %v208
        %371 = vmatmul.f32.gmra.mxu0 %v212
        %v372 = vpop.f32.mrf.mxu0
        %v373 = vadd.f32 0.0, %v372
        %374 = vmatmul.f32.gmra.mxu0 %v215
        %v375 = vpop.f32.mrf.mxu0
        %v376 = vadd.f32 0.0, %v375
        %377 = vdwg.mxu0
        %378 = vmatpush.msra.mxu0 0.0
        %379 = vmatpush.msra.mxu0 0.0
        %380 = vmatpush.msra.mxu0 0.0
        %381 = vmatpush.msra.mxu0 0.0
        %382 = vmatpush.msra.mxu0 0.0
        %383 = vmatpush.msra.mxu0 0.0
        %384 = vmatpush.msra.mxu0 0.0
        %385 = vmatpush.msra.mxu0 0.0
        %386 = vmatpush.msra.mxu0 0.0
        %387 = vmatpush.msra.mxu0 0.0
        %388 = vmatpush.msra.mxu0 0.0
        %389 = vmatpush.msra.mxu0 0.0
        %390 = vmatpush.msra.mxu0 0.0
        %391 = vmatpush.msra.mxu0 0.0
        %392 = vmatpush.msra.mxu0 0.0
        %393 = vmatpush.msra.mxu0 %v209
        %394 = vmatmul.f32.gmra.mxu0 %v212
        %v395 = vpop.f32.mrf.mxu0
        %v396 = vadd.f32 0.0, %v395
        %397 = vmatmul.f32.gmra.mxu0 %v215
        %v398 = vpop.f32.mrf.mxu0
        %v399 = vadd.f32 0.0, %v398
        %400 = vdwg.mxu0
        %401 = vst [vmem:[%s198] sm:$0xff] %v235
        %402 = vst [vmem:[%s198 + $0x8] sm:$0xff] %v258
        %403 = vst [vmem:[%s198 + $0x10] sm:$0xff] %v281
        %404 = vst [vmem:[%s198 + $0x18] sm:$0xff] %v304
        %405 = vst [vmem:[%s198 + $0x20] sm:$0xff] %v327
        %406 = vst [vmem:[%s198 + $0x28] sm:$0xff] %v350
        %407 = vst [vmem:[%s198 + $0x30] sm:$0xff] %v373
        %408 = vst [vmem:[%s198 + $0x38] sm:$0xff] %v396
        %409 = vst [vmem:[%s198 + $0x40] sm:$0xff] %v238
        %410 = vst [vmem:[%s198 + $0x48] sm:$0xff] %v261
        %411 = vst [vmem:[%s198 + $0x50] sm:$0xff] %v284
        %412 = vst [vmem:[%s198 + $0x58] sm:$0xff] %v307
        %413 = vst [vmem:[%s198 + $0x60] sm:$0xff] %v330
        %414 = vst [vmem:[%s198 + $0x68] sm:$0xff] %v353
        %415 = vst [vmem:[%s198 + $0x70] sm:$0xff] %v376
        %416 = vst [vmem:[%s198 + $0x78] sm:$0xff] %v399
        %s417 = smul.u32 8, %s19
        %p418 = scmp.lt.s32.totalorder %s18, 5
        %s419 = scalar_select %p418, %s18, 5
        %p420 = scmp.lt.s32.totalorder %s417, 7
        %s421 = scalar_select %p420, %s417, 7
        %s422 = smul.addr %s419, 16
        %s423 = sadd.s32 %s421, %s422
        %s424 = smul.addr %s423, 8
        %s425 = scalar_lea.vmem %s2, %s424
        // Predicated region
        $region33: #{resize_transform.3} parent=27 // pred_check
          %p426 = pneg %p95
        $region34: #{resize_transform.3} parent=27 // pred_check_branch
          %428 = sbr.rel (%p426) target = $region36
        $region35: #{resize_transform.3} parent=27 // pred_region
          %s429 = smul.u32 8, %s19
        $region36: #{resize_transform.3} parent=27 // pred_fallthru
          _
      $region28: #{resize_transform.3} parent=5 // pred_fallthru
        _
      %p430 = scmp.le.s32.totalorder 2, %s9
      // Predicated region
      $region37: #{resize_transform.3} parent=5 // pred_check
        %p431 = pneg %p430
      $region38: #{resize_transform.3} parent=5 // pred_check_branch
        %433 = sbr.rel (%p431) target = $region40
      $region39: #{resize_transform.3} parent=5 // pred_region
        %s434 = ssub.s32 %s9, 2
        // Predicated region
        $region41: #{resize_transform.3} parent=39 // pred_check
          %p435 = pneg %p101
        $region42: #{resize_transform.3} parent=39 // pred_check_branch
          %437 = sbr.rel (%p435) target = $region44
        $region43: #{resize_transform.3} parent=39 // pred_region
          %s438 = smul.u32 8, %s21
          %p439 = scmp.lt.s32.totalorder %s20, 5
          %s440 = scalar_select %p439, %s20, 5
          %p441 = scmp.lt.s32.totalorder %s438, 7
          %s442 = scalar_select %p441, %s438, 7
          %s443 = smul.addr %s440, 16
          %s444 = sadd.s32 %s442, %s443
          %s445 = smul.addr %s444, 8
          %s446 = scalar_lea.vmem %s2, %s445
        $region44: #{resize_transform.3} parent=39 // pred_fallthru
          _
      $region40: #{resize_transform.3} parent=5 // pred_fallthru
        _
    $region6: #{resize_transform.3} parent=1 // loop_footer
      %s13 = sadd.s32 1, %s9
    $region7: #{resize_transform.3} parent=1 // loop_footer_branch
      %8 = sbr.rel target = $region3
    $region8: #{resize_transform.3} parent=1 // loop_exit
      _
    %447 = vsyncpa [#allocation3], 1
    %s448 = scalar_lea.sflag [#allocation3], 1
    %449 = vsyncpa %s448, 1

// kernel: resize_transform.2
$region0: #{resize_transform.2}
  #allocation0 [shape = 'u32[]', space=smem, size = 0x4, offset = 0x4, fixed_abs, tag = 'smem constant byte address 0x4 - core index']
  #allocation1 [shape = 'u32[72,128]{1,0:T(1,128)}', space=vmem, size = 0x9000, scoped, tag = 'internal scratch']
  %s0 = inlined_call_operand.hbm [shape: f32[48,16,16], index: 0, kind: input, shape index: {}]
  %s1 = inlined_call_operand.hbm [shape: f32[32,16], index: 1, kind: input, shape index: {}]
  %s2 = inlined_call_operand.hbm [shape: f32[16,32], index: 2, kind: input, shape index: {}]
  %s3 = inlined_call_operand.vmem [shape: f32[48,32,32], index: 3, kind: output, shape index: {}]
  %s4 = sld [smem:[#allocation0]]
  $region57: #{resize_transform.2} parent=0
    _
  %s6 = ssub.s32 1, %s4
  %s7 = scalar_select 0, %s6, %s4
  $region1: #{resize_transform.2} parent=0
    #allocation2 [shape = 'u8[16384]{0}', space=vmem, size = 0x4000, scoped, tag = 'input window, operand 0']
    #allocation3 [shape = 's32[2]{0}', space=sflag, size = 0x8, scoped, tag = 'scoped memory for resize_transform.2']
    #allocation4 [shape = 'u8[16384]{0}', space=vmem, size = 0x4000, scoped, tag = 'input window, operand 1, single buffered']
    #allocation5 [shape = 's32[1]{0}', space=sflag, size = 0x4, scoped, tag = 'scoped memory for resize_transform.2']
    #allocation6 [shape = 'u8[8192]{0}', space=vmem, size = 0x2000, scoped, tag = 'input window, operand 2, single buffered']
    %8 = vsyncpa [#allocation3], 0
    %s9 = scalar_lea.sflag [#allocation3], 1
    %10 = vsyncpa %s9, 0
    %11 = vsyncpa [#allocation5], 0
    loop: start=0, step=1, limit=50
    $region2: #{resize_transform.2} parent=1 // loop_pre_header
      _
    $region3: #{resize_transform.2} parent=1 // loop_header
      %s13 = sphi 0, %s17
      %p14 = scmp.ge.s32.totalorder %s13, 50
      %s23 = sphi 0, %s25
      %s26 = sphi 0, %s23
      %s27 = sphi 0, %s26
      %s43 = sphi 0, %s27
      %s47 = sphi 0, %s47
      %s49 = sphi 0, %s47
      %s50 = sphi 0, %s49
      %s64 = sphi 0, %s50
      %s68 = sphi 0, %s68
      %s70 = sphi 0, %s68
      %s71 = sphi 0, %s70
      %s85 = sphi 0, %s71
      %s91 = sphi 0, %s93
      %s94 = sphi 0, %s91
      %s95 = sphi 0, %s94
      %s111 = sphi 0, %s95
    $region4: #{resize_transform.2} parent=1 // loop_header_branch
      %16 = sbr.rel (%p14) target = $region8
    $region5: #{resize_transform.2} parent=1 // loop_body
      %s18 = ssub.s32 %s13, 1
      %s19 = ssub.s32 %s13, 2
      %s20 = sadd.s32 %s13, 1
      %s21 = ssub.s32 %s13, %s20
      %p22 = scmp.eq.s32.totalorder %s21, 0
      %s24 = sadd.s32 %s23, 1
      %s25 = scalar_select %p22, %s23, %s24
      %p28 = pneg %p22
      %p29 = scmp.eq.s32.totalorder %s13, 47
      %p30 = por %p28, %p29
      %p31 = scmp.ne.s32.totalorder %s23, %s26
      %p32 = scmp.eq.s32.totalorder %s13, 0
      %p33 = por %p31, %p32
      %p34 = scmp.ne.s32.totalorder %s23, %s26
      %p35 = scmp.eq.s32.totalorder %s18, 47
      %p36 = por %p34, %p35
      %p37 = scmp.ne.s32.totalorder %s26, %s27
      %p38 = scmp.eq.s32.totalorder %s18, 0
      %p39 = por %p37, %p38
      %p40 = scmp.ne.s32.totalorder %s26, %s27
      %p41 = scmp.eq.s32.totalorder %s19, 47
      %p42 = por %p40, %p41
      %p44 = scmp.ne.s32.totalorder %s27, %s43
      %p45 = scmp.eq.s32.totalorder %s19, 0
      %p46 = por %p44, %p45
      %s48 = sadd.s32 %s47, 1
      %p51 = scmp.eq.s32.totalorder %s13, 47
      %p52 = scmp.ne.s32.totalorder %s47, %s49
      %p53 = scmp.eq.s32.totalorder %s13, 0
      %p54 = por %p52, %p53
      %p55 = scmp.ne.s32.totalorder %s47, %s49
      %p56 = scmp.eq.s32.totalorder %s18, 47
      %p57 = por %p55, %p56
      %p58 = scmp.ne.s32.totalorder %s49, %s50
      %p59 = scmp.eq.s32.totalorder %s18, 0
      %p60 = por %p58, %p59
      %p61 = scmp.ne.s32.totalorder %s49, %s50
      %p62 = scmp.eq.s32.totalorder %s19, 47
      %p63 = por %p61, %p62
      %p65 = scmp.ne.s32.totalorder %s50, %s64
      %p66 = scmp.eq.s32.totalorder %s19, 0
      %p67 = por %p65, %p66
      %s69 = sadd.s32 %s68, 1
      %p72 = scmp.eq.s32.totalorder %s13, 47
      %p73 = scmp.ne.s32.totalorder %s68, %s70
      %p74 = scmp.eq.s32.totalorder %s13, 0
      %p75 = por %p73, %p74
      %p76 = scmp.ne.s32.totalorder %s68, %s70
      %p77 = scmp.eq.s32.totalorder %s18, 47
      %p78 = por %p76, %p77
      %p79 = scmp.ne.s32.totalorder %s70, %s71
      %p80 = scmp.eq.s32.totalorder %s18, 0
      %p81 = por %p79, %p80
      %p82 = scmp.ne.s32.totalorder %s70, %s71
      %p83 = scmp.eq.s32.totalorder %s19, 47
      %p84 = por %p82, %p83
      %p86 = scmp.ne.s32.totalorder %s71, %s85
      %p87 = scmp.eq.s32.totalorder %s19, 0
      %p88 = por %p86, %p87
      %s89 = ssub.s32 %s13, %s20
      %p90 = scmp.eq.s32.totalorder %s89, 0
      %s92 = sadd.s32 %s91, 1
      %s93 = scalar_select %p90, %s91, %s92
      %p96 = pneg %p90
      %p97 = scmp.eq.s32.totalorder %s13, 47
      %p98 = por %p96, %p97
      %p99 = scmp.ne.s32.totalorder %s91, %s94
      %p100 = scmp.eq.s32.totalorder %s13, 0
      %p101 = por %p99, %p100
      %p102 = scmp.ne.s32.totalorder %s91, %s94
      %p103 = scmp.eq.s32.totalorder %s18, 47
      %p104 = por %p102, %p103
      %p105 = scmp.ne.s32.totalorder %s94, %s95
      %p106 = scmp.eq.s32.totalorder %s18, 0
      %p107 = por %p105, %p106
      %p108 = scmp.ne.s32.totalorder %s94, %s95
      %p109 = scmp.eq.s32.totalorder %s19, 47
      %p110 = por %p108, %p109
      %p112 = scmp.ne.s32.totalorder %s95, %s111
      %p113 = scmp.eq.s32.totalorder %s19, 0
      %p114 = por %p112, %p113
      %p115 = scmp.le.s32.totalorder 1, %s13
      %p116 = scmp.lt.s32.totalorder %s13, 49
      %p117 = pnand %p115, %p116
      %p118 = pneg %p117
      // Predicated region
      $region9: #{resize_transform.2} parent=5 // pred_check
        _
      $region10: #{resize_transform.2} parent=5 // pred_check_branch
        %120 = sbr.rel (%p117) target = $region12
      $region11: #{resize_transform.2} parent=5 // pred_region
        %s121 = ssub.s32 %s13, 1
        // Predicated region
        $region13: #{resize_transform.2} parent=11 // pred_check
          %p122 = pneg %p60
        $region14: #{resize_transform.2} parent=11 // pred_check_branch
          %124 = sbr.rel (%p122) target = $region16
        $region15: #{resize_transform.2} parent=11 // pred_region
          %126 = vsyncadd [#allocation5], 0
          %s127 = sshll.u32 %s1, 4
          %s128 = int_to_ptr.hbm [resolvable:$true] %s127
          %s129 = sshll.u32 [#allocation4], 4
          %s130 = int_to_ptr.vmem [resolvable:$true] %s129
          %135 = dma.hbm_to_vmem [thread:$0]  %s128, 512, %s130, [#allocation5], 128, 128, 8
        $region16: #{resize_transform.2} parent=11 // pred_fallthru
          _
        // Predicated region
        $region17: #{resize_transform.2} parent=11 // pred_check
          %p136 = pneg %p81
        $region18: #{resize_transform.2} parent=11 // pred_check_branch
          %138 = sbr.rel (%p136) target = $region20
        $region19: #{resize_transform.2} parent=11 // pred_region
          %140 = vsyncadd [#allocation5], 0
          %s141 = sshll.u32 %s2, 4
          %s142 = int_to_ptr.hbm [resolvable:$true] %s141
          %s143 = sshll.u32 [#allocation6], 4
          %s144 = int_to_ptr.vmem [resolvable:$true] %s143
          %149 = dma.hbm_to_vmem [thread:$0]  %s142, 256, %s144, [#allocation5], 128, 128, 8
        $region20: #{resize_transform.2} parent=11 // pred_fallthru
          _
      $region12: #{resize_transform.2} parent=5 // pred_fallthru
        _
      %p150 = scmp.lt.s32.totalorder %s13, 48
      // Predicated region
      $region21: #{resize_transform.2} parent=5 // pred_check
        %p151 = pneg %p150
      $region22: #{resize_transform.2} parent=5 // pred_check_branch
        %153 = sbr.rel (%p151) target = $region24
      $region23: #{resize_transform.2} parent=5 // pred_region
        // Predicated region
        $region25: #{resize_transform.2} parent=23 // pred_check
          %p154 = pneg %p33
        $region26: #{resize_transform.2} parent=23 // pred_check_branch
          %156 = sbr.rel (%p154) target = $region28
        $region27: #{resize_transform.2} parent=23 // pred_region
          %s157 = sand.u32 %s23, 1
          %s158 = scalar_lea.sflag [#allocation3], %s157
          %s159 = sand.u32 %s23, 1
          %s160 = smul.addr %s159, 16
          %s161 = scalar_lea.vmem [#allocation2], %s160
          %163 = vsyncadd %s158, 0
          %s164 = smul.addr %s13, 2
          %s165 = smul.addr %s164, 8
          %s166 = scalar_lea.hbm %s0, %s165
          %s167 = sshll.u32 %s166, 4
          %s168 = int_to_ptr.hbm [resolvable:$true] %s167
          %s169 = sshll.u32 %s161, 4
          %s170 = int_to_ptr.vmem [resolvable:$true] %s169
          %175 = dma.hbm_to_vmem [thread:$0]  %s168, 256, %s170, %s158, 128, 128, 8
        $region28: #{resize_transform.2} parent=23 // pred_fallthru
          _
      $region24: #{resize_transform.2} parent=5 // pred_fallthru
        _
      %p176 = scmp.le.s32.totalorder 1, %s13
      %p177 = scmp.lt.s32.totalorder %s13, 49
      %p178 = pnand %p176, %p177
      %p179 = pneg %p178
      // Predicated region
      $region29: #{resize_transform.2} parent=5 // pred_check
        _
      $region30: #{resize_transform.2} parent=5 // pred_check_branch
        %181 = sbr.rel (%p178) target = $region32
      $region31: #{resize_transform.2} parent=5 // pred_region
        %s182 = ssub.s32 %s13, 1
        %s183 = sand.u32 %s26, 1
        %s184 = scalar_lea.sflag [#allocation3], %s183
        %s185 = sand.u32 %s26, 1
        %s186 = smul.addr %s185, 16
        %s187 = scalar_lea.vmem [#allocation2], %s186
        // Predicated region
        $region33: #{resize_transform.2} parent=31 // pred_check
          %p188 = pneg %p39
        $region34: #{resize_transform.2} parent=31 // pred_check_branch
          %190 = sbr.rel (%p188) target = $region36
        $region35: #{resize_transform.2} parent=31 // pred_region
          %192 = dma.done %s184, 256
        $region36: #{resize_transform.2} parent=31 // pred_fallthru
          _
        // Predicated region
        $region37: #{resize_transform.2} parent=31 // pred_check
          %p193 = pneg %p60
        $region38: #{resize_transform.2} parent=31 // pred_check_branch
          %195 = sbr.rel (%p193) target = $region40
        $region39: #{resize_transform.2} parent=31 // pred_region
          %197 = dma.done [#allocation5], 512
        $region40: #{resize_transform.2} parent=31 // pred_fallthru
          _
        // Predicated region
        $region41: #{resize_transform.2} parent=31 // pred_check
          %p198 = pneg %p81
        $region42: #{resize_transform.2} parent=31 // pred_check_branch
          %200 = sbr.rel (%p198) target = $region44
        $region43: #{resize_transform.2} parent=31 // pred_region
          %202 = dma.done [#allocation5], 256
        $region44: #{resize_transform.2} parent=31 // pred_fallthru
          _
        %s203 = sand.u32 %s26, 1
        %s204 = scalar_lea.sflag [#allocation3], %s203
        %s205 = sand.u32 %s26, 1
        %s206 = smul.addr %s205, 16
        %s207 = scalar_lea.vmem [#allocation2], %s206
        %p208 = pneg %p39
        %p209 = pneg %p36
        %p210 = pneg %p60
        %p211 = pneg %p57
        %p212 = pneg %p81
        %p213 = pneg %p78
        %p214 = pneg %p107
        %p215 = pneg %p104
        %p216 = scmp.lt.s32.totalorder %s18, 47
        %s217 = scalar_select %p216, %s18, 47
        %s218 = smul.addr %s217, 4
        %s219 = smul.addr %s218, 8
        %s220 = scalar_lea.vmem %s3, %s219
        %p221 = scmp.lt.s32.totalorder %s18, 47
        %s222 = scalar_select %p221, %s18, 47
        %s223 = smul.addr %s222, 4
        %s224 = smul.addr %s223, 8
        %s225 = scalar_lea.vmem %s3, %s224
        %v226 = vld [vmem:[%s187] sm:$0xff]
        %v227 = vld [vmem:[%s187 + $0x8] sm:$0xff]
        %v228 = vld [vmem:[#allocation4] sm:$0xff]
        %v229 = vld [vmem:[#allocation4 + $0x8] sm:$0xff]
        %v230 = vld [vmem:[#allocation4 + $0x10] sm:$0xff]
        %v231 = vld [vmem:[#allocation4 + $0x18] sm:$0xff]
        %vm232 = vcmask 130048
        %v234 = vsel %vm232, %v228, 0
        %v237 = vsel %vm232, %v229, 0
        %v240 = vsel %vm232, %v230, 0
        %v243 = vsel %vm232, %v231, 0
        %245 = vmatpush.msra.mxu0 0.0
        %246 = vmatpush.msra.mxu0 0.0
        %247 = vmatpush.msra.mxu0 0.0
        %248 = vmatpush.msra.mxu0 0.0
        %249 = vmatpush.msra.mxu0 0.0
        %250 = vmatpush.msra.mxu0 0.0
        %251 = vmatpush.msra.mxu0 0.0
        %252 = vmatpush.msra.mxu0 0.0
        %253 = vmatpush.msra.mxu0 0.0
        %254 = vmatpush.msra.mxu0 0.0
        %255 = vmatpush.msra.mxu0 0.0
        %256 = vmatpush.msra.mxu0 0.0
        %257 = vmatpush.msra.mxu0 0.0
        %258 = vmatpush.msra.mxu0 0.0
        %259 = vmatpush.msra.mxu0 %v227
        %260 = vmatpush.msra.mxu0 %v226
        %261 = vmatmul.f32.gmra.mxu0 %v234
        %v262 = vpop.f32.mrf.mxu0
        %v263 = vadd.f32 0.0, %v262
        %264 = vmatmul.f32.gmra.mxu0 %v237
        %v265 = vpop.f32.mrf.mxu0
        %v266 = vadd.f32 0.0, %v265
        %267 = vmatmul.f32.gmra.mxu0 %v240
        %v268 = vpop.f32.mrf.mxu0
        %v269 = vadd.f32 0.0, %v268
        %270 = vmatmul.f32.gmra.mxu0 %v243
        %v271 = vpop.f32.mrf.mxu0
        %v272 = vadd.f32 0.0, %v271
        %273 = vdwg.mxu0
        %v274 = vld [vmem:[#allocation6] sm:$0xff]
        %v275 = vld [vmem:[#allocation6 + $0x8] sm:$0xff]
        %v277 = vsel %vm232, %v263, 0
        %v280 = vsel %vm232, %v266, 0
        %v283 = vsel %vm232, %v269, 0
        %v286 = vsel %vm232, %v272, 0
        %288 = vmatpush.msra.mxu0 0.0
        %289 = vmatpush.msra.mxu0 0.0
        %290 = vmatpush.msra.mxu0 0.0
        %291 = vmatpush.msra.mxu0 0.0
        %292 = vmatpush.msra.mxu0 0.0
        %293 = vmatpush.msra.mxu0 0.0
        %294 = vmatpush.msra.mxu0 0.0
        %295 = vmatpush.msra.mxu0 0.0
        %296 = vmatpush.msra.mxu0 0.0
        %297 = vmatpush.msra.mxu0 0.0
        %298 = vmatpush.msra.mxu0 0.0
        %299 = vmatpush.msra.mxu0 0.0
        %300 = vmatpush.msra.mxu0 0.0
        %301 = vmatpush.msra.mxu0 0.0
        %302 = vmatpush.msra.mxu0 %v275
        %303 = vmatpush.msra.mxu0 %v274
        %304 = vmatmul.f32.gmra.mxu0 %v277
        %v305 = vpop.f32.mrf.mxu0
        %v306 = vadd.f32 0.0, %v305
        %307 = vmatmul.f32.gmra.mxu0 %v280
        %v308 = vpop.f32.mrf.mxu0
        %v309 = vadd.f32 0.0, %v308
        %310 = vmatmul.f32.gmra.mxu0 %v283
        %v311 = vpop.f32.mrf.mxu0
        %v312 = vadd.f32 0.0, %v311
        %313 = vmatmul.f32.gmra.mxu0 %v286
        %v314 = vpop.f32.mrf.mxu0
        %v315 = vadd.f32 0.0, %v314
        %316 = vdwg.mxu0
        %vm317 = vcmask 261120
        %318 = vst.msk [vmem:[%s225] sm:$0xff] %vm317, %v306
        %319 = vst.msk [vmem:[%s225 + $0x8] sm:$0xff] %vm317, %v309
        %320 = vst.msk [vmem:[%s225 + $0x10] sm:$0xff] %vm317, %v312
        %321 = vst.msk [vmem:[%s225 + $0x18] sm:$0xff] %vm317, %v315
        %p322 = scmp.lt.s32.totalorder %s18, 47
        %s323 = scalar_select %p322, %s18, 47
        %s324 = smul.addr %s323, 4
        %s325 = smul.addr %s324, 8
        %s326 = scalar_lea.vmem %s3, %s325
        // Predicated region
        $region45: #{resize_transform.2} parent=31 // pred_check
          %p327 = pneg %p104
        $region46: #{resize_transform.2} parent=31 // pred_check_branch
          %329 = sbr.rel (%p327) target = $region48
        $region47: #{resize_transform.2} parent=31 // pred_region
          _
        $region48: #{resize_transform.2} parent=31 // pred_fallthru
          _
      $region32: #{resize_transform.2} parent=5 // pred_fallthru
        _
      %p330 = scmp.le.s32.totalorder 2, %s13
      // Predicated region
      $region49: #{resize_transform.2} parent=5 // pred_check
        %p331 = pneg %p330
      $region50: #{resize_transform.2} parent=5 // pred_check_branch
        %333 = sbr.rel (%p331) target = $region52
      $region51: #{resize_transform.2} parent=5 // pred_region
        %s334 = ssub.s32 %s13, 2
        // Predicated region
        $region53: #{resize_transform.2} parent=51 // pred_check
          %p335 = pneg %p110
        $region54: #{resize_transform.2} parent=51 // pred_check_branch
          %337 = sbr.rel (%p335) target = $region56
        $region55: #{resize_transform.2} parent=51 // pred_region
          %p338 = scmp.lt.s32.totalorder %s19, 47
          %s339 = scalar_select %p338, %s19, 47
          %s340 = smul.addr %s339, 4
          %s341 = smul.addr %s340, 8
          %s342 = scalar_lea.vmem %s3, %s341
        $region56: #{resize_transform.2} parent=51 // pred_fallthru
          _
      $region52: #{resize_transform.2} parent=5 // pred_fallthru
        _
    $region6: #{resize_transform.2} parent=1 // loop_footer
      %s17 = sadd.s32 1, %s13
    $region7: #{resize_transform.2} parent=1 // loop_footer_branch
      %12 = sbr.rel target = $region3
    $region8: #{resize_transform.2} parent=1 // loop_exit
      _
    %343 = vsyncpa [#allocation3], 1
    %s344 = scalar_lea.sflag [#allocation3], 1
    %345 = vsyncpa %s344, 1
    %346 = vsyncpa [#allocation5], 1

</llo_original>
